<compile_context>
chip_gen: v7x
topology: tpu7x:2x2x1
jax: 0.10.0
libtpu: 0.0.40
codegen_flags: <defaults>
</compile_context>

<pallas_src>
import jax
import jax.numpy as jnp
from jax.experimental import pallas as pl
from jax.experimental.pallas import tpu as pltpu

NEG_SLOPE = 0.01  # PyTorch nn.LeakyReLU default negative_slope


def _round_up(v, m):
    return ((v + m - 1) // m) * m


def _zmodel_kernel(x_ref, wc_ref, bc_ref, mut_ref, m_ref,
                   w_top_ref, w_bot_ref, bh_ref, y_ref):
    f32 = jnp.float32

    # --- MAN.controler: Linear + LeakyReLU (MXU in native dtype, f32 acc) ---
    h = jnp.dot(x_ref[...], wc_ref[...], preferred_element_type=f32)     # (BB, H)
    h = h + bc_ref[...].astype(f32)
    h = jnp.where(h >= 0, h, NEG_SLOPE * h)                              # f32

    op_dtype = m_ref.dtype
    h_op = h.astype(op_dtype)                                            # no-op if f32

    # --- MAN.read_head: cosine similarity + softmax ---
    # 1/||M_row|| is folded into the pre-transposed memory (wrapper constant).
    sim_num = jnp.dot(h_op, mut_ref[...], preferred_element_type=f32)    # (BB, MEM)
    inv_k = 1.0 / (jnp.sqrt(jnp.sum(h * h, axis=-1, keepdims=True)) + 1e-8)  # (BB, 1)
    sim = sim_num * inv_k

    # cosine similarity is bounded in [-1, 1] -> no max-subtraction needed
    p = jnp.exp(sim)
    w_r = p * pl.reciprocal(jnp.sum(p, axis=-1, keepdims=True), approx=True)  # (BB, MEM)

    # --- memory read ---
    read_i = jnp.dot(w_r.astype(op_dtype), m_ref[...],
                     preferred_element_type=f32)                         # (BB, H)

    # --- fused Task1/Task2 heads on concat([h, read_i]) as split matmuls ---
    y = (jnp.dot(h.astype(w_top_ref.dtype), w_top_ref[...],
                 preferred_element_type=f32)
         + jnp.dot(read_i.astype(w_bot_ref.dtype), w_bot_ref[...],
                   preferred_element_type=f32)
         + bh_ref[...].astype(f32))                                      # (BB, 3)

    y_ref[...] = y.astype(y_ref.dtype)


def zmodel_forward(x, wc, bc, memory, w1, b1, w2, b2, *, block_b=1024):
    """Pallas equivalent of Z_Model.forward(X) -> (y1, y2).

    x:      (B, vec_size)
    wc/bc:  controller Linear (vec_size, hsize) / (hsize,)
    memory: MAN memory state M, (memory_size, hsize)
    w1/b1:  Task1 Linear (2*hsize, 2) / (2,)
    w2/b2:  Task2 Linear (2*hsize, 1) / (1,)
    """
    B, V = x.shape
    Vw, H = wc.shape
    MEM, Hm = memory.shape
    assert Vw == V and Hm == H
    assert w1.shape == (2 * H, 2) and b1.shape == (2,)
    assert w2.shape == (2 * H, 1) and b2.shape == (1,)

    f32 = jnp.float32

    # ---- constant per-call preprocessing (hoisted out of the kernel) -------
    # memory-row norms + transpose folded into a row-normalized M^T
    m_f32 = memory.astype(f32)
    m_nrm = jnp.sqrt(jnp.sum(m_f32 * m_f32, axis=-1, keepdims=True))
    m_unit_t = (m_f32 / (m_nrm + 1e-8)).astype(memory.dtype).T           # (H, MEM)

    # fused task heads: (2H, 3) weight split into top/bottom halves, (1, 3) bias
    w_head = jnp.concatenate([w1, w2], axis=-1)                          # (2H, 3)
    w_top, w_bot = w_head[:H, :], w_head[H:, :]
    b_head = jnp.concatenate([b1, b2], axis=-1).reshape(1, 3)
    bc2 = bc.reshape(1, H)

    # ---- batch-tile selection ----------------------------------------------
    #  * multiple of 8 (sublane rule) unless it covers the full batch
    #  * at least 2 grid steps for large batches (v7x megacore has 2 TCs)
    if B <= 16:
        bb = B
    else:
        half = _round_up(-(-B // 2), 8)                                  # ceil(B/2) -> x8
        bb = max(8, min((block_b // 8) * 8, half))
    grid = (pl.cdiv(B, bb),)

    # scoped-VMEM limit: only raise above the default when the tile is large
    # (v5e default scoped limit is 16 MiB); cap with v7x's 64 MiB/TC in mind.
    itemsize = jnp.dtype(x.dtype).itemsize
    mem_pad = _round_up(MEM, 128)
    est = 2 * bb * V * itemsize + 4 * bb * (3 * mem_pad + 4 * H)
    vmem_limit = None
    if est > 12 * 1024 * 1024:
        vmem_limit = min(64 * 1024 * 1024, _round_up(2 * est, 1 << 20))

    bcast = lambda i: (0, 0)

    y = pl.pallas_call(
        _zmodel_kernel,
        out_shape=jax.ShapeDtypeStruct((B, 3), x.dtype),
        grid_spec=pltpu.PrefetchScalarGridSpec(
            num_scalar_prefetch=0,
            grid=grid,
            in_specs=[
                pl.BlockSpec((bb, V), lambda i: (i, 0)),   # X (batch-tiled)
                pl.BlockSpec((V, H), bcast),               # Wc
                pl.BlockSpec((1, H), bcast),               # bc
                pl.BlockSpec((H, MEM), bcast),             # row-normalized M^T
                pl.BlockSpec((MEM, H), bcast),             # M (for the read)
                pl.BlockSpec((H, 3), bcast),               # fused head W, top half
                pl.BlockSpec((H, 3), bcast),               # fused head W, bottom half
                pl.BlockSpec((1, 3), bcast),               # fused head bias
            ],
            out_specs=pl.BlockSpec((bb, 3), lambda i: (i, 0)),
        ),
        compiler_params=pltpu.CompilerParams(
            dimension_semantics=("parallel",),
            vmem_limit_bytes=vmem_limit,
        ),
    )(x, wc, bc2, m_unit_t, memory, w_top, w_bot, b_head)

    return y[:, :2], y[:, 2:3]


if __name__ == "__main__":
    key = jax.random.PRNGKey(0)
    ks = jax.random.split(key, 8)

    # Small shapes consistent with the module: batch=8, vec_size=32, hsize=32,
    # memory_size=250 (Z_Model default).
    B, V, H, MEM = 8, 32, 32, 250
    x = jax.random.normal(ks[0], (B, V), jnp.float32)
    wc = jax.random.normal(ks[1], (V, H), jnp.float32) * 0.1
    bc = jax.random.normal(ks[2], (H,), jnp.float32) * 0.1
    # MAN memory state (freshly-constructed module has zeros; use a nonzero
    # state here to exercise the cosine/read path).
    memory = jax.random.normal(ks[3], (MEM, H), jnp.float32) * 0.1
    w1 = jax.random.normal(ks[4], (2 * H, 2), jnp.float32) * 0.1
    b1 = jax.random.normal(ks[5], (2,), jnp.float32) * 0.1
    w2 = jax.random.normal(ks[6], (2 * H, 1), jnp.float32) * 0.1
    b2 = jax.random.normal(ks[7], (1,), jnp.float32) * 0.1

    y1, y2 = zmodel_forward(x, wc, bc, memory, w1, b1, w2, b2)
    y1, y2 = jax.block_until_ready((y1, y2))

    # ---- plain-JAX reference (module semantics) -----------------------------
    h = x @ wc + bc
    h = jnp.where(h >= 0, h, NEG_SLOPE * h)
    inner = h @ memory.T
    k_nrm = jnp.sqrt(jnp.sum(h * h, axis=-1, keepdims=True))
    m_nrm = jnp.sqrt(jnp.sum(memory * memory, axis=-1, keepdims=True))
    sim = inner / (k_nrm @ m_nrm.T + 1e-8)
    w_r = jax.nn.softmax(sim, axis=-1)
    read_i = w_r @ memory
    y_t = jnp.concatenate([h, read_i], axis=-1)
    r1 = y_t @ w1 + b1
    r2 = y_t @ w2 + b2

    assert jnp.allclose(y1, r1, rtol=5e-5, atol=2e-5), (y1, r1)
    assert jnp.allclose(y2, r2, rtol=5e-5, atol=2e-5), (y2, r2)

    print("KERNEL_OK")
</pallas_src>

<mosaic_0001>
module attributes {stable_mosaic.version = 11 : i64} {
  func.func @_zmodel_kernel(%arg0: i32, %arg1: memref<8x32xf32, #tpu.memory_space<vmem>>, %arg2: memref<32x32xf32, #tpu.memory_space<vmem>>, %arg3: memref<1x32xf32, #tpu.memory_space<vmem>>, %arg4: memref<32x250xf32, #tpu.memory_space<vmem>>, %arg5: memref<250x32xf32, #tpu.memory_space<vmem>>, %arg6: memref<32x3xf32, #tpu.memory_space<vmem>>, %arg7: memref<32x3xf32, #tpu.memory_space<vmem>>, %arg8: memref<1x3xf32, #tpu.memory_space<vmem>>, %arg9: memref<8x3xf32, #tpu.memory_space<vmem>>) attributes {dimension_semantics = [#tpu.dimension_semantics<parallel>], iteration_bounds = array<i64: 1>, scalar_prefetch = 0 : i64, scratch_operands = 0 : i64, tpu.core_type = #tpu.core_type<tc>, window_params = [{transform_indices = @transform_0, window_bounds = array<i64: 8, 32>}, {pipeline_mode = #tpu.pipeline_mode<synchronous>, transform_indices = @transform_1, window_bounds = array<i64: 32, 32>}, {pipeline_mode = #tpu.pipeline_mode<synchronous>, transform_indices = @transform_2, window_bounds = array<i64: 1, 32>}, {pipeline_mode = #tpu.pipeline_mode<synchronous>, transform_indices = @transform_3, window_bounds = array<i64: 32, 250>}, {pipeline_mode = #tpu.pipeline_mode<synchronous>, transform_indices = @transform_4, window_bounds = array<i64: 250, 32>}, {pipeline_mode = #tpu.pipeline_mode<synchronous>, transform_indices = @transform_5, window_bounds = array<i64: 32, 3>}, {pipeline_mode = #tpu.pipeline_mode<synchronous>, transform_indices = @transform_6, window_bounds = array<i64: 32, 3>}, {pipeline_mode = #tpu.pipeline_mode<synchronous>, transform_indices = @transform_7, window_bounds = array<i64: 1, 3>}, {transform_indices = @transform_8, window_bounds = array<i64: 8, 3>}]} {
    %c0 = arith.constant 0 : index
    %c0_0 = arith.constant 0 : index
    %0 = vector.load %arg1[%c0, %c0_0] : memref<8x32xf32, #tpu.memory_space<vmem>>, vector<8x32xf32>
    %c0_1 = arith.constant 0 : index
    %c0_2 = arith.constant 0 : index
    %1 = vector.load %arg2[%c0_1, %c0_2] : memref<32x32xf32, #tpu.memory_space<vmem>>, vector<32x32xf32>
    %cst = arith.constant dense<0.000000e+00> : vector<8x32xf32>
    %2 = tpu.matmul %0, %1, %cst {dimension_numbers = #tpu.dot_dimension_numbers<[1], [0], [0], [1], [0, 0, 1, 1], [], []>} : vector<8x32xf32>, vector<32x32xf32>, vector<8x32xf32> -> vector<8x32xf32>
    %c0_3 = arith.constant 0 : index
    %c0_4 = arith.constant 0 : index
    %3 = vector.load %arg3[%c0_3, %c0_4] : memref<1x32xf32, #tpu.memory_space<vmem>>, vector<1x32xf32>
    %4 = vector.broadcast %3 : vector<1x32xf32> to vector<8x32xf32>
    %5 = arith.addf %2, %4 : vector<8x32xf32>
    %cst_5 = arith.constant 0.000000e+00 : f32
    %6 = vector.broadcast %cst_5 : f32 to vector<8x32xf32>
    %7 = arith.cmpf oge, %5, %6 : vector<8x32xf32>
    %cst_6 = arith.constant 0.00999999977 : f32
    %8 = vector.broadcast %cst_6 : f32 to vector<8x32xf32>
    %9 = arith.mulf %8, %5 : vector<8x32xf32>
    %10 = arith.select %7, %5, %9 : vector<8x32xi1>, vector<8x32xf32>
    %c0_7 = arith.constant 0 : index
    %c0_8 = arith.constant 0 : index
    %11 = vector.load %arg4[%c0_7, %c0_8] : memref<32x250xf32, #tpu.memory_space<vmem>>, vector<32x250xf32>
    %cst_9 = arith.constant dense<0.000000e+00> : vector<8x250xf32>
    %12 = tpu.matmul %10, %11, %cst_9 {dimension_numbers = #tpu.dot_dimension_numbers<[1], [0], [0], [1], [0, 0, 1, 1], [], []>} : vector<8x32xf32>, vector<32x250xf32>, vector<8x250xf32> -> vector<8x250xf32>
    %13 = arith.mulf %10, %10 : vector<8x32xf32>
    %cst_10 = arith.constant dense<0.000000e+00> : vector<8xf32>
    %14 = vector.multi_reduction <add>, %13, %cst_10 [1] : vector<8x32xf32> to vector<8xf32>
    %15 = vector.shape_cast %14 : vector<8xf32> to vector<8x1xf32>
    %16 = math.sqrt %15 : vector<8x1xf32>
    %cst_11 = arith.constant 9.99999993E-9 : f32
    %17 = vector.broadcast %cst_11 : f32 to vector<8x1xf32>
    %18 = arith.addf %16, %17 : vector<8x1xf32>
    %cst_12 = arith.constant 1.000000e+00 : f32
    %19 = vector.broadcast %cst_12 : f32 to vector<8x1xf32>
    %20 = arith.divf %19, %18 : vector<8x1xf32>
    %21 = vector.broadcast %20 : vector<8x1xf32> to vector<8x250xf32>
    %22 = arith.mulf %12, %21 : vector<8x250xf32>
    %23 = math.exp %22 : vector<8x250xf32>
    %cst_13 = arith.constant dense<0.000000e+00> : vector<8xf32>
    %24 = vector.multi_reduction <add>, %23, %cst_13 [1] : vector<8x250xf32> to vector<8xf32>
    %25 = vector.shape_cast %24 : vector<8xf32> to vector<8x1xf32>
    %26 = tpu.reciprocal %25 {approx = true} : vector<8x1xf32> -> vector<8x1xf32>
    %27 = vector.broadcast %26 : vector<8x1xf32> to vector<8x250xf32>
    %28 = arith.mulf %23, %27 : vector<8x250xf32>
    %c0_14 = arith.constant 0 : index
    %c0_15 = arith.constant 0 : index
    %29 = vector.load %arg5[%c0_14, %c0_15] : memref<250x32xf32, #tpu.memory_space<vmem>>, vector<250x32xf32>
    %cst_16 = arith.constant dense<0.000000e+00> : vector<8x32xf32>
    %30 = tpu.matmul %28, %29, %cst_16 {dimension_numbers = #tpu.dot_dimension_numbers<[1], [0], [0], [1], [0, 0, 1, 1], [], []>} : vector<8x250xf32>, vector<250x32xf32>, vector<8x32xf32> -> vector<8x32xf32>
    %c0_17 = arith.constant 0 : index
    %c0_18 = arith.constant 0 : index
    %31 = vector.load %arg6[%c0_17, %c0_18] : memref<32x3xf32, #tpu.memory_space<vmem>>, vector<32x3xf32>
    %cst_19 = arith.constant dense<0.000000e+00> : vector<8x3xf32>
    %32 = tpu.matmul %10, %31, %cst_19 {dimension_numbers = #tpu.dot_dimension_numbers<[1], [0], [0], [1], [0, 0, 1, 1], [], []>} : vector<8x32xf32>, vector<32x3xf32>, vector<8x3xf32> -> vector<8x3xf32>
    %c0_20 = arith.constant 0 : index
    %c0_21 = arith.constant 0 : index
    %33 = vector.load %arg7[%c0_20, %c0_21] : memref<32x3xf32, #tpu.memory_space<vmem>>, vector<32x3xf32>
    %cst_22 = arith.constant dense<0.000000e+00> : vector<8x3xf32>
    %34 = tpu.matmul %30, %33, %cst_22 {dimension_numbers = #tpu.dot_dimension_numbers<[1], [0], [0], [1], [0, 0, 1, 1], [], []>} : vector<8x32xf32>, vector<32x3xf32>, vector<8x3xf32> -> vector<8x3xf32>
    %35 = arith.addf %32, %34 : vector<8x3xf32>
    %c0_23 = arith.constant 0 : index
    %c0_24 = arith.constant 0 : index
    %36 = vector.load %arg8[%c0_23, %c0_24] : memref<1x3xf32, #tpu.memory_space<vmem>>, vector<1x3xf32>
    %37 = vector.broadcast %36 : vector<1x3xf32> to vector<8x3xf32>
    %38 = arith.addf %35, %37 : vector<8x3xf32>
    %c0_25 = arith.constant 0 : index
    %c0_26 = arith.constant 0 : index
    %39 = vector.load %arg9[%c0_25, %c0_26] : memref<8x3xf32, #tpu.memory_space<vmem>>, vector<8x3xf32>
    tpu.vector_store %arg9[%c0_25, %c0_26], %38 {strides = array<i32>} : memref<8x3xf32, #tpu.memory_space<vmem>>, vector<8x3xf32>,
    return
  }
  func.func @transform_0(%arg0: i32) -> (i32, i32) {
    %c0_i32 = arith.constant 0 : i32
    %c0_i32_0 = arith.constant 0 : i32
    return %arg0, %c0_i32 : i32, i32
  }
  func.func @transform_1(%arg0: i32) -> (i32, i32) {
    %c0_i32 = arith.constant 0 : i32
    %c0_i32_0 = arith.constant 0 : i32
    %c0_i32_1 = arith.constant 0 : i32
    return %c0_i32, %c0_i32_0 : i32, i32
  }
  func.func @transform_2(%arg0: i32) -> (i32, i32) {
    %c0_i32 = arith.constant 0 : i32
    %c0_i32_0 = arith.constant 0 : i32
    %c0_i32_1 = arith.constant 0 : i32
    return %c0_i32, %c0_i32_0 : i32, i32
  }
  func.func @transform_3(%arg0: i32) -> (i32, i32) {
    %c0_i32 = arith.constant 0 : i32
    %c0_i32_0 = arith.constant 0 : i32
    %c0_i32_1 = arith.constant 0 : i32
    return %c0_i32, %c0_i32_0 : i32, i32
  }
  func.func @transform_4(%arg0: i32) -> (i32, i32) {
    %c0_i32 = arith.constant 0 : i32
    %c0_i32_0 = arith.constant 0 : i32
    %c0_i32_1 = arith.constant 0 : i32
    return %c0_i32, %c0_i32_0 : i32, i32
  }
  func.func @transform_5(%arg0: i32) -> (i32, i32) {
    %c0_i32 = arith.constant 0 : i32
    %c0_i32_0 = arith.constant 0 : i32
    %c0_i32_1 = arith.constant 0 : i32
    return %c0_i32, %c0_i32_0 : i32, i32
  }
  func.func @transform_6(%arg0: i32) -> (i32, i32) {
    %c0_i32 = arith.constant 0 : i32
    %c0_i32_0 = arith.constant 0 : i32
    %c0_i32_1 = arith.constant 0 : i32
    return %c0_i32, %c0_i32_0 : i32, i32
  }
  func.func @transform_7(%arg0: i32) -> (i32, i32) {
    %c0_i32 = arith.constant 0 : i32
    %c0_i32_0 = arith.constant 0 : i32
    %c0_i32_1 = arith.constant 0 : i32
    return %c0_i32, %c0_i32_0 : i32, i32
  }
  func.func @transform_8(%arg0: i32) -> (i32, i32) {
    %c0_i32 = arith.constant 0 : i32
    %c0_i32_0 = arith.constant 0 : i32
    return %arg0, %c0_i32 : i32, i32
  }
}

</mosaic_0001>

<llo_original>
// kernel: tpu_custom_call.1
$region0: #{tpu_custom_call.1}
  #allocation0 [shape = 'u32[]', space=smem, size = 0x4, offset = 0x4, fixed_abs, tag = 'smem constant byte address 0x4 - core index']
  #allocation1 [shape = 'u32[144,128]{1,0:T(1,128)}', space=vmem, size = 0x12000, scoped, tag = 'internal scratch']
  %s0 = inlined_call_operand.vmem [shape: f32[8,32], index: 0, kind: input, shape index: {}]
  %s1 = inlined_call_operand.vmem [shape: f32[32,32], index: 1, kind: input, shape index: {}]
  %s2 = inlined_call_operand.vmem [shape: f32[1,32], index: 2, kind: input, shape index: {}]
  %s3 = inlined_call_operand.vmem [shape: f32[32,250], index: 3, kind: input, shape index: {}]
  %s4 = inlined_call_operand.vmem [shape: f32[250,32], index: 4, kind: input, shape index: {}]
  %s5 = inlined_call_operand.vmem [shape: f32[32,3], index: 5, kind: input, shape index: {}]
  %s6 = inlined_call_operand.vmem [shape: f32[32,3], index: 6, kind: input, shape index: {}]
  %s7 = inlined_call_operand.vmem [shape: f32[1,3], index: 7, kind: input, shape index: {}]
  %s8 = inlined_call_operand.vmem [shape: f32[8,3], index: 8, kind: output, shape index: {}]
  %s9 = sld [smem:[#allocation0]]
  $region42: #{tpu_custom_call.1} parent=0
    _
  %s11 = ssub.s32 1, %s9
  %s12 = scalar_select 0, %s11, %s9
  // Predicated region
  $region2: #{tpu_custom_call.1} parent=0 // pred_check
    _
  $region3: #{tpu_custom_call.1} parent=0 // pred_check_branch
    %14 = sbr.rel (0) target = $region5
  $region4: #{tpu_custom_call.1} parent=0 // pred_region
    _
  $region5: #{tpu_custom_call.1} parent=0 // pred_fallthru
    _
  // Predicated region
  $region6: #{tpu_custom_call.1} parent=0 // pred_check
    _
  $region7: #{tpu_custom_call.1} parent=0 // pred_check_branch
    %16 = sbr.rel (0) target = $region9
  $region8: #{tpu_custom_call.1} parent=0 // pred_region
    _
  $region9: #{tpu_custom_call.1} parent=0 // pred_fallthru
    _
  // Predicated region
  $region10: #{tpu_custom_call.1} parent=0 // pred_check
    _
  $region11: #{tpu_custom_call.1} parent=0 // pred_check_branch
    %18 = sbr.rel (0) target = $region13
  $region12: #{tpu_custom_call.1} parent=0 // pred_region
    _
  $region13: #{tpu_custom_call.1} parent=0 // pred_fallthru
    _
  // Predicated region
  $region14: #{tpu_custom_call.1} parent=0 // pred_check
    _
  $region15: #{tpu_custom_call.1} parent=0 // pred_check_branch
    %20 = sbr.rel (0) target = $region17
  $region16: #{tpu_custom_call.1} parent=0 // pred_region
    _
  $region17: #{tpu_custom_call.1} parent=0 // pred_fallthru
    _
  // Predicated region
  $region18: #{tpu_custom_call.1} parent=0 // pred_check
    _
  $region19: #{tpu_custom_call.1} parent=0 // pred_check_branch
    %22 = sbr.rel (0) target = $region21
  $region20: #{tpu_custom_call.1} parent=0 // pred_region
    _
  $region21: #{tpu_custom_call.1} parent=0 // pred_fallthru
    _
  // Predicated region
  $region22: #{tpu_custom_call.1} parent=0 // pred_check
    _
  $region23: #{tpu_custom_call.1} parent=0 // pred_check_branch
    %24 = sbr.rel (0) target = $region25
  $region24: #{tpu_custom_call.1} parent=0 // pred_region
    _
  $region25: #{tpu_custom_call.1} parent=0 // pred_fallthru
    _
  // Predicated region
  $region26: #{tpu_custom_call.1} parent=0 // pred_check
    _
  $region27: #{tpu_custom_call.1} parent=0 // pred_check_branch
    %26 = sbr.rel (0) target = $region29
  $region28: #{tpu_custom_call.1} parent=0 // pred_region
    _
  $region29: #{tpu_custom_call.1} parent=0 // pred_fallthru
    _
  // Predicated region
  $region30: #{tpu_custom_call.1} parent=0 // pred_check
    _
  $region31: #{tpu_custom_call.1} parent=0 // pred_check_branch
    %28 = sbr.rel (0) target = $region33
  $region32: #{tpu_custom_call.1} parent=0 // pred_region
    _
  $region33: #{tpu_custom_call.1} parent=0 // pred_fallthru
    _
  %v29 = vld [vmem:[%s0] sm:$0xff]
  %v30 = vld [vmem:[%s1] sm:$0xff]
  %v31 = vld [vmem:[%s1 + $0x8] sm:$0xff]
  %v32 = vld [vmem:[%s1 + $0x10] sm:$0xff]
  %v33 = vld [vmem:[%s1 + $0x18] sm:$0xff]
  %v34 = vld [vmem:[%s2] sm:$0x1]
  %v36 = vlaneseq
  %v37 = vshrl.u32 %v36, 7
  %v38 = vsub.s32 0, %v37
  %v39 = vrot.slane %v34, %v38
  %vm41 = vcmask 261120
  %v43 = vsel %vm41, %v29, 0
  %45 = vmatprep.subr.mxu0 0.0
  %46 = vmatpush1.msra.mxu0 %v30
  %47 = vmatprep.subr.mxu0 0.0
  %48 = vmatpush1.msra.mxu0 %v31
  %49 = vmatprep.subr.mxu0 0.0
  %50 = vmatpush1.msra.mxu0 %v32
  %51 = vmatprep.subr.mxu0 0.0
  %52 = vmatpush1.msra.mxu0 %v33
  %53 = vmatprep.subr.mxu0 0.0
  %54 = vmatpush1.msra.mxu0 0.0
  %55 = vmatprep.subr.mxu0 0.0
  %56 = vmatpush1.msra.mxu0 0.0
  %57 = vmatprep.subr.mxu0 0.0
  %58 = vmatpush1.msra.mxu0 0.0
  %59 = vmatprep.subr.mxu0 0.0
  %60 = vmatpush1.msra.mxu0 0.0
  %61 = vmatprep.subr.mxu0 0.0
  %62 = vmatpush1.msra.mxu0 0.0
  %63 = vmatprep.subr.mxu0 0.0
  %64 = vmatpush1.msra.mxu0 0.0
  %65 = vmatprep.subr.mxu0 0.0
  %66 = vmatpush1.msra.mxu0 0.0
  %67 = vmatprep.subr.mxu0 0.0
  %68 = vmatpush1.msra.mxu0 0.0
  %69 = vmatprep.subr.mxu0 0.0
  %70 = vmatpush1.msra.mxu0 0.0
  %71 = vmatprep.subr.mxu0 0.0
  %72 = vmatpush1.msra.mxu0 0.0
  %73 = vmatprep.subr.mxu0 0.0
  %74 = vmatpush1.msra.mxu0 0.0
  %75 = vmatprep.subr.mxu0 0.0
  %76 = vmatpush1.msra.mxu0 0.0
  %77 = vmatprep.subr.mxu0 0.0
  %78 = vmatpush1.msra.mxu0 0.0
  %79 = vmatprep.subr.mxu0 0.0
  %80 = vmatpush1.msra.mxu0 0.0
  %81 = vmatprep.subr.mxu0 0.0
  %82 = vmatpush1.msra.mxu0 0.0
  %83 = vmatprep.subr.mxu0 0.0
  %84 = vmatpush1.msra.mxu0 0.0
  %85 = vmatprep.subr.mxu0 0.0
  %86 = vmatpush1.msra.mxu0 0.0
  %87 = vmatprep.subr.mxu0 0.0
  %88 = vmatpush1.msra.mxu0 0.0
  %89 = vmatprep.subr.mxu0 0.0
  %90 = vmatpush1.msra.mxu0 0.0
  %91 = vmatprep.subr.mxu0 0.0
  %92 = vmatpush1.msra.mxu0 0.0
  %93 = vmatprep.subr.mxu0 0.0
  %94 = vmatpush1.msra.mxu0 0.0
  %95 = vmatprep.subr.mxu0 0.0
  %96 = vmatpush1.msra.mxu0 0.0
  %97 = vmatprep.subr.mxu0 0.0
  %98 = vmatpush1.msra.mxu0 0.0
  %99 = vmatprep.subr.mxu0 0.0
  %100 = vmatpush1.msra.mxu0 0.0
  %101 = vmatprep.subr.mxu0 0.0
  %102 = vmatpush1.msra.mxu0 0.0
  %103 = vmatprep.subr.mxu0 0.0
  %104 = vmatpush1.msra.mxu0 0.0
  %105 = vmatprep.subr.mxu0 0.0
  %106 = vmatpush1.msra.mxu0 0.0
  %107 = vmatprep.subr.mxu0 0.0
  %108 = vmatpush1.msra.mxu0 0.0
  %109 = vmatprep.mubr.f32.mxu0 0.0
  %110 = vmatmul.mubr.f32.gmra.mrb[0].mxu0 %v43
  %v111 = vpop.f32.mrb[0].mxu0
  %v112 = vadd.f32 %v39, %v111
  %v113 = vpop.f32.mrb[0].mxu0
  %114 = vdwg.mxu0
  %vm115 = vcmp.ge.f32.partialorder %v112, 0.0
  %v116 = vmul.f32 %v112, 0.01
  %v117 = vsel %vm115, %v112, %v116
  %v118 = vld [vmem:[%s3] sm:$0xff]
  %v119 = vld [vmem:[%s3 + $0x8] sm:$0xff]
  %v120 = vld [vmem:[%s3 + $0x10] sm:$0xff]
  %v121 = vld [vmem:[%s3 + $0x18] sm:$0xff]
  %v122 = vld [vmem:[%s3 + $0x20] sm:$0xff]
  %v123 = vld [vmem:[%s3 + $0x28] sm:$0xff]
  %v124 = vld [vmem:[%s3 + $0x30] sm:$0xff]
  %v125 = vld [vmem:[%s3 + $0x38] sm:$0xff]
  %v127 = vsel %vm41, %v117, 0
  %129 = vmatprep.subr.mxu0 %v119
  %130 = vmatpush1.msra.mxu0 %v118
  %131 = vmatprep.subr.mxu0 %v121
  %132 = vmatpush1.msra.mxu0 %v120
  %133 = vmatprep.subr.mxu0 %v123
  %134 = vmatpush1.msra.mxu0 %v122
  %135 = vmatprep.subr.mxu0 %v125
  %136 = vmatpush1.msra.mxu0 %v124
  %137 = vmatprep.subr.mxu0 0.0
  %138 = vmatpush1.msra.mxu0 0.0
  %139 = vmatprep.subr.mxu0 0.0
  %140 = vmatpush1.msra.mxu0 0.0
  %141 = vmatprep.subr.mxu0 0.0
  %142 = vmatpush1.msra.mxu0 0.0
  %143 = vmatprep.subr.mxu0 0.0
  %144 = vmatpush1.msra.mxu0 0.0
  %145 = vmatprep.subr.mxu0 0.0
  %146 = vmatpush1.msra.mxu0 0.0
  %147 = vmatprep.subr.mxu0 0.0
  %148 = vmatpush1.msra.mxu0 0.0
  %149 = vmatprep.subr.mxu0 0.0
  %150 = vmatpush1.msra.mxu0 0.0
  %151 = vmatprep.subr.mxu0 0.0
  %152 = vmatpush1.msra.mxu0 0.0
  %153 = vmatprep.subr.mxu0 0.0
  %154 = vmatpush1.msra.mxu0 0.0
  %155 = vmatprep.subr.mxu0 0.0
  %156 = vmatpush1.msra.mxu0 0.0
  %157 = vmatprep.subr.mxu0 0.0
  %158 = vmatpush1.msra.mxu0 0.0
  %159 = vmatprep.subr.mxu0 0.0
  %160 = vmatpush1.msra.mxu0 0.0
  %161 = vmatprep.subr.mxu0 0.0
  %162 = vmatpush1.msra.mxu0 0.0
  %163 = vmatprep.subr.mxu0 0.0
  %164 = vmatpush1.msra.mxu0 0.0
  %165 = vmatprep.subr.mxu0 0.0
  %166 = vmatpush1.msra.mxu0 0.0
  %167 = vmatprep.subr.mxu0 0.0
  %168 = vmatpush1.msra.mxu0 0.0
  %169 = vmatprep.subr.mxu0 0.0
  %170 = vmatpush1.msra.mxu0 0.0
  %171 = vmatprep.subr.mxu0 0.0
  %172 = vmatpush1.msra.mxu0 0.0
  %173 = vmatprep.subr.mxu0 0.0
  %174 = vmatpush1.msra.mxu0 0.0
  %175 = vmatprep.subr.mxu0 0.0
  %176 = vmatpush1.msra.mxu0 0.0
  %177 = vmatprep.subr.mxu0 0.0
  %178 = vmatpush1.msra.mxu0 0.0
  %179 = vmatprep.subr.mxu0 0.0
  %180 = vmatpush1.msra.mxu0 0.0
  %181 = vmatprep.subr.mxu0 0.0
  %182 = vmatpush1.msra.mxu0 0.0
  %183 = vmatprep.subr.mxu0 0.0
  %184 = vmatpush1.msra.mxu0 0.0
  %185 = vmatprep.subr.mxu0 0.0
  %186 = vmatpush1.msra.mxu0 0.0
  %187 = vmatprep.subr.mxu0 0.0
  %188 = vmatpush1.msra.mxu0 0.0
  %189 = vmatprep.subr.mxu0 0.0
  %190 = vmatpush1.msra.mxu0 0.0
  %191 = vmatprep.subr.mxu0 0.0
  %192 = vmatpush1.msra.mxu0 0.0
  %193 = vmatprep.mubr.f32.mxu0 0.0
  %194 = vmatmul.mubr.f32.gmra.mrb[0].mxu0 %v127
  %v195 = vpop.f32.mrb[0].mxu0
  %v196 = vadd.f32 0.0, %v195
  %v197 = vpop.f32.mrb[0].mxu0
  %v198 = vadd.f32 0.0, %v197
  %199 = vdwg.mxu0
  %v200 = vmul.f32 %v117, %v117
  %v201 = vsel %vm41, %v200, 0.0
  %202 = vadd.xlane.f32.xlu0 %v201
  %v203 = vpop.xlane.xlu0 %202
  %v204 = vrsqrt.pop %v203
  %v205 = vmul.f32 %v203, %v204
  %vm206 = vcmp.eq.f32.partialorder %v203, inf
  %v207 = vsel %vm206, %v203, %v205
  %vm208 = vcmp.eq.f32.partialorder %v203, 0.0
  %v209 = vand.u32 %v203, 2147483648
  %v210 = vsel %vm208, %v209, %v207
  %v211 = vadd.f32 %v210, 1e-08
  %v212 = vrcp.pop %v211
  %v213 = vmul.f32 1.0, %v212
  %v214 = vmul.f32 %v196, %v213
  %v215 = vmul.f32 %v198, %v213
  %v216 = vmul.f32 %v214, 1.442695
  %v217 = vpow.pop %v216
  %v218 = vmul.f32 %v215, 1.442695
  %v219 = vpow.pop %v218
  %vm220 = vcmask 998400
  %v221 = vsel %vm220, %v219, 0.0
  %v222 = vadd.f32 %v217, %v221
  %223 = vadd.xlane.f32.xlu0 %v222
  %v224 = vpop.xlane.xlu0 %223
  %v225 = vrcp.pop %v224
  %v226 = vmul.f32 %v217, %v225
  %v227 = vmul.f32 %v219, %v225
  %v228 = vld [vmem:[%s4] sm:$0xff]
  %v229 = vld [vmem:[%s4 + $0x8] sm:$0xff]
  %v230 = vld [vmem:[%s4 + $0x10] sm:$0xff]
  %v231 = vld [vmem:[%s4 + $0x18] sm:$0xff]
  %v232 = vld [vmem:[%s4 + $0x20] sm:$0xff]
  %v233 = vld [vmem:[%s4 + $0x28] sm:$0xff]
  %v234 = vld [vmem:[%s4 + $0x30] sm:$0xff]
  %v235 = vld [vmem:[%s4 + $0x38] sm:$0xff]
  %v236 = vld [vmem:[%s4 + $0x40] sm:$0xff]
  %v237 = vld [vmem:[%s4 + $0x48] sm:$0xff]
  %v238 = vld [vmem:[%s4 + $0x50] sm:$0xff]
  %v239 = vld [vmem:[%s4 + $0x58] sm:$0xff]
  %v240 = vld [vmem:[%s4 + $0x60] sm:$0xff]
  %v241 = vld [vmem:[%s4 + $0x68] sm:$0xff]
  %v242 = vld [vmem:[%s4 + $0x70] sm:$0xff]
  %v243 = vld [vmem:[%s4 + $0x78] sm:$0xff]
  %v244 = vld [vmem:[%s4 + $0x80] sm:$0xff]
  %v245 = vld [vmem:[%s4 + $0x88] sm:$0xff]
  %v246 = vld [vmem:[%s4 + $0x90] sm:$0xff]
  %v247 = vld [vmem:[%s4 + $0x98] sm:$0xff]
  %v248 = vld [vmem:[%s4 + $0xa0] sm:$0xff]
  %v249 = vld [vmem:[%s4 + $0xa8] sm:$0xff]
  %v250 = vld [vmem:[%s4 + $0xb0] sm:$0xff]
  %v251 = vld [vmem:[%s4 + $0xb8] sm:$0xff]
  %v252 = vld [vmem:[%s4 + $0xc0] sm:$0xff]
  %v253 = vld [vmem:[%s4 + $0xc8] sm:$0xff]
  %v254 = vld [vmem:[%s4 + $0xd0] sm:$0xff]
  %v255 = vld [vmem:[%s4 + $0xd8] sm:$0xff]
  %v256 = vld [vmem:[%s4 + $0xe0] sm:$0xff]
  %v257 = vld [vmem:[%s4 + $0xe8] sm:$0xff]
  %v258 = vld [vmem:[%s4 + $0xf0] sm:$0xff]
  %v259 = vld [vmem:[%s4 + $0xf8] sm:$0x3]
  %v261 = vsel %vm220, %v227, 0
  %vm263 = vcmask 1041408
  %v265 = vsel %vm263, %v259, 0
  %267 = vmatprep.subr.mxu0 0.0
  %268 = vmatpush1.msra.mxu0 %v228
  %269 = vmatprep.subr.mxu0 0.0
  %270 = vmatpush1.msra.mxu0 %v229
  %271 = vmatprep.subr.mxu0 0.0
  %272 = vmatpush1.msra.mxu0 %v230
  %273 = vmatprep.subr.mxu0 0.0
  %274 = vmatpush1.msra.mxu0 %v231
  %275 = vmatprep.subr.mxu0 0.0
  %276 = vmatpush1.msra.mxu0 %v232
  %277 = vmatprep.subr.mxu0 0.0
  %278 = vmatpush1.msra.mxu0 %v233
  %279 = vmatprep.subr.mxu0 0.0
  %280 = vmatpush1.msra.mxu0 %v234
  %281 = vmatprep.subr.mxu0 0.0
  %282 = vmatpush1.msra.mxu0 %v235
  %283 = vmatprep.subr.mxu0 0.0
  %284 = vmatpush1.msra.mxu0 %v236
  %285 = vmatprep.subr.mxu0 0.0
  %286 = vmatpush1.msra.mxu0 %v237
  %287 = vmatprep.subr.mxu0 0.0
  %288 = vmatpush1.msra.mxu0 %v238
  %289 = vmatprep.subr.mxu0 0.0
  %290 = vmatpush1.msra.mxu0 %v239
  %291 = vmatprep.subr.mxu0 0.0
  %292 = vmatpush1.msra.mxu0 %v240
  %293 = vmatprep.subr.mxu0 0.0
  %294 = vmatpush1.msra.mxu0 %v241
  %295 = vmatprep.subr.mxu0 0.0
  %296 = vmatpush1.msra.mxu0 %v242
  %297 = vmatprep.subr.mxu0 0.0
  %298 = vmatpush1.msra.mxu0 %v243
  %299 = vmatprep.subr.mxu0 0.0
  %300 = vmatpush1.msra.mxu0 %v244
  %301 = vmatprep.subr.mxu0 0.0
  %302 = vmatpush1.msra.mxu0 %v245
  %303 = vmatprep.subr.mxu0 0.0
  %304 = vmatpush1.msra.mxu0 %v246
  %305 = vmatprep.subr.mxu0 0.0
  %306 = vmatpush1.msra.mxu0 %v247
  %307 = vmatprep.subr.mxu0 0.0
  %308 = vmatpush1.msra.mxu0 %v248
  %309 = vmatprep.subr.mxu0 0.0
  %310 = vmatpush1.msra.mxu0 %v249
  %311 = vmatprep.subr.mxu0 0.0
  %312 = vmatpush1.msra.mxu0 %v250
  %313 = vmatprep.subr.mxu0 0.0
  %314 = vmatpush1.msra.mxu0 %v251
  %315 = vmatprep.subr.mxu0 0.0
  %316 = vmatpush1.msra.mxu0 %v252
  %317 = vmatprep.subr.mxu0 0.0
  %318 = vmatpush1.msra.mxu0 %v253
  %319 = vmatprep.subr.mxu0 0.0
  %320 = vmatpush1.msra.mxu0 %v254
  %321 = vmatprep.subr.mxu0 0.0
  %322 = vmatpush1.msra.mxu0 %v255
  %323 = vmatprep.subr.mxu0 0.0
  %324 = vmatpush1.msra.mxu0 %v256
  %325 = vmatprep.subr.mxu0 0.0
  %326 = vmatpush1.msra.mxu0 %v257
  %327 = vmatprep.subr.mxu0 0.0
  %328 = vmatpush1.msra.mxu0 %v258
  %329 = vmatprep.subr.mxu0 0.0
  %330 = vmatpush1.msra.mxu0 %v265
  %331 = vmatprep.mubr.f32.mxu0 %v261
  %332 = vmatmul.mubr.f32.gmra.mrb[0].mxu0 %v226
  %v333 = vpop.f32.mrb[0].mxu0
  %v334 = vadd.f32 0.0, %v333
  %v335 = vpop.f32.mrb[0].mxu0
  %336 = vdwg.mxu0
  %v337 = vld [vmem:[%s5] sm:$0xff]
  %v338 = vld [vmem:[%s5 + $0x8] sm:$0xff]
  %v339 = vld [vmem:[%s5 + $0x10] sm:$0xff]
  %v340 = vld [vmem:[%s5 + $0x18] sm:$0xff]
  %v341 = vld [vmem:[%s6] sm:$0xff]
  %v342 = vld [vmem:[%s6 + $0x8] sm:$0xff]
  %v343 = vld [vmem:[%s6 + $0x10] sm:$0xff]
  %v344 = vld [vmem:[%s6 + $0x18] sm:$0xff]
  %v346 = vsel %vm41, %v334, 0
  %348 = vmatprep.subr.mxu0 0.0
  %349 = vmatpush1.msra.mxu0 %v341
  %350 = vmatprep.subr.mxu0 0.0
  %351 = vmatpush1.msra.mxu0 %v342
  %352 = vmatprep.subr.mxu0 0.0
  %353 = vmatpush1.msra.mxu0 %v343
  %354 = vmatprep.subr.mxu0 0.0
  %355 = vmatpush1.msra.mxu0 %v344
  %356 = vmatprep.subr.mxu0 0.0
  %357 = vmatpush1.msra.mxu0 0.0
  %358 = vmatprep.subr.mxu0 0.0
  %359 = vmatpush1.msra.mxu0 0.0
  %360 = vmatprep.subr.mxu0 0.0
  %361 = vmatpush1.msra.mxu0 0.0
  %362 = vmatprep.subr.mxu0 0.0
  %363 = vmatpush1.msra.mxu0 0.0
  %364 = vmatprep.subr.mxu0 0.0
  %365 = vmatpush1.msra.mxu0 0.0
  %366 = vmatprep.subr.mxu0 0.0
  %367 = vmatpush1.msra.mxu0 0.0
  %368 = vmatprep.subr.mxu0 0.0
  %369 = vmatpush1.msra.mxu0 0.0
  %370 = vmatprep.subr.mxu0 0.0
  %371 = vmatpush1.msra.mxu0 0.0
  %372 = vmatprep.subr.mxu0 0.0
  %373 = vmatpush1.msra.mxu0 0.0
  %374 = vmatprep.subr.mxu0 0.0
  %375 = vmatpush1.msra.mxu0 0.0
  %376 = vmatprep.subr.mxu0 0.0
  %377 = vmatpush1.msra.mxu0 0.0
  %378 = vmatprep.subr.mxu0 0.0
  %379 = vmatpush1.msra.mxu0 0.0
  %380 = vmatprep.subr.mxu0 0.0
  %381 = vmatpush1.msra.mxu0 0.0
  %382 = vmatprep.subr.mxu0 0.0
  %383 = vmatpush1.msra.mxu0 0.0
  %384 = vmatprep.subr.mxu0 0.0
  %385 = vmatpush1.msra.mxu0 0.0
  %386 = vmatprep.subr.mxu0 0.0
  %387 = vmatpush1.msra.mxu0 0.0
  %388 = vmatprep.subr.mxu0 0.0
  %389 = vmatpush1.msra.mxu0 0.0
  %390 = vmatprep.subr.mxu0 0.0
  %391 = vmatpush1.msra.mxu0 0.0
  %392 = vmatprep.subr.mxu0 0.0
  %393 = vmatpush1.msra.mxu0 0.0
  %394 = vmatprep.subr.mxu0 0.0
  %395 = vmatpush1.msra.mxu0 0.0
  %396 = vmatprep.subr.mxu0 0.0
  %397 = vmatpush1.msra.mxu0 0.0
  %398 = vmatprep.subr.mxu0 0.0
  %399 = vmatpush1.msra.mxu0 0.0
  %400 = vmatprep.subr.mxu0 0.0
  %401 = vmatpush1.msra.mxu0 0.0
  %402 = vmatprep.subr.mxu0 0.0
  %403 = vmatpush1.msra.mxu0 0.0
  %404 = vmatprep.subr.mxu0 0.0
  %405 = vmatpush1.msra.mxu0 0.0
  %406 = vmatprep.subr.mxu0 0.0
  %407 = vmatpush1.msra.mxu0 0.0
  %408 = vmatprep.subr.mxu0 0.0
  %409 = vmatpush1.msra.mxu0 0.0
  %410 = vmatprep.subr.mxu0 0.0
  %411 = vmatpush1.msra.mxu0 0.0
  %412 = vmatprep.mubr.f32.mxu0 0.0
  %413 = vmatmul.mubr.f32.gmra.mrb[0].mxu0 %v346
  %v414 = vpop.f32.mrb[0].mxu0
  %v415 = vadd.f32 0.0, %v414
  %v416 = vpop.f32.mrb[0].mxu0
  %417 = vdwg.mxu0
  %418 = vmatprep.subr.mxu0 0.0
  %419 = vmatpush1.msra.mxu0 %v337
  %420 = vmatprep.subr.mxu0 0.0
  %421 = vmatpush1.msra.mxu0 %v338
  %422 = vmatprep.subr.mxu0 0.0
  %423 = vmatpush1.msra.mxu0 %v339
  %424 = vmatprep.subr.mxu0 0.0
  %425 = vmatpush1.msra.mxu0 %v340
  %426 = vmatprep.subr.mxu0 0.0
  %427 = vmatpush1.msra.mxu0 0.0
  %428 = vmatprep.subr.mxu0 0.0
  %429 = vmatpush1.msra.mxu0 0.0
  %430 = vmatprep.subr.mxu0 0.0
  %431 = vmatpush1.msra.mxu0 0.0
  %432 = vmatprep.subr.mxu0 0.0
  %433 = vmatpush1.msra.mxu0 0.0
  %434 = vmatprep.subr.mxu0 0.0
  %435 = vmatpush1.msra.mxu0 0.0
  %436 = vmatprep.subr.mxu0 0.0
  %437 = vmatpush1.msra.mxu0 0.0
  %438 = vmatprep.subr.mxu0 0.0
  %439 = vmatpush1.msra.mxu0 0.0
  %440 = vmatprep.subr.mxu0 0.0
  %441 = vmatpush1.msra.mxu0 0.0
  %442 = vmatprep.subr.mxu0 0.0
  %443 = vmatpush1.msra.mxu0 0.0
  %444 = vmatprep.subr.mxu0 0.0
  %445 = vmatpush1.msra.mxu0 0.0
  %446 = vmatprep.subr.mxu0 0.0
  %447 = vmatpush1.msra.mxu0 0.0
  %448 = vmatprep.subr.mxu0 0.0
  %449 = vmatpush1.msra.mxu0 0.0
  %450 = vmatprep.subr.mxu0 0.0
  %451 = vmatpush1.msra.mxu0 0.0
  %452 = vmatprep.subr.mxu0 0.0
  %453 = vmatpush1.msra.mxu0 0.0
  %454 = vmatprep.subr.mxu0 0.0
  %455 = vmatpush1.msra.mxu0 0.0
  %456 = vmatprep.subr.mxu0 0.0
  %457 = vmatpush1.msra.mxu0 0.0
  %458 = vmatprep.subr.mxu0 0.0
  %459 = vmatpush1.msra.mxu0 0.0
  %460 = vmatprep.subr.mxu0 0.0
  %461 = vmatpush1.msra.mxu0 0.0
  %462 = vmatprep.subr.mxu0 0.0
  %463 = vmatpush1.msra.mxu0 0.0
  %464 = vmatprep.subr.mxu0 0.0
  %465 = vmatpush1.msra.mxu0 0.0
  %466 = vmatprep.subr.mxu0 0.0
  %467 = vmatpush1.msra.mxu0 0.0
  %468 = vmatprep.subr.mxu0 0.0
  %469 = vmatpush1.msra.mxu0 0.0
  %470 = vmatprep.subr.mxu0 0.0
  %471 = vmatpush1.msra.mxu0 0.0
  %472 = vmatprep.subr.mxu0 0.0
  %473 = vmatpush1.msra.mxu0 0.0
  %474 = vmatprep.subr.mxu0 0.0
  %475 = vmatpush1.msra.mxu0 0.0
  %476 = vmatprep.subr.mxu0 0.0
  %477 = vmatpush1.msra.mxu0 0.0
  %478 = vmatprep.subr.mxu0 0.0
  %479 = vmatpush1.msra.mxu0 0.0
  %480 = vmatprep.subr.mxu0 0.0
  %481 = vmatpush1.msra.mxu0 0.0
  %482 = vmatprep.mubr.f32.mxu0 0.0
  %483 = vmatmul.mubr.f32.gmra.mrb[0].mxu0 %v127
  %v484 = vpop.f32.mrb[0].mxu0
  %v485 = vadd.f32 %v415, %v484
  %v486 = vpop.f32.mrb[0].mxu0
  %487 = vdwg.mxu0
  %v488 = vld [vmem:[%s7] sm:$0x1]
  %v490 = vlaneseq
  %v491 = vshrl.u32 %v490, 7
  %v492 = vsub.s32 0, %v491
  %v493 = vrot.slane %v488, %v492
  %v495 = vadd.f32 %v485, %v493
  %vm496 = vcmask 23552
  %497 = vst.msk [vmem:[%s8] sm:$0xff] %vm496, %v495
  // Predicated region
  $region34: #{tpu_custom_call.1} parent=0 // pred_check
    _
  $region35: #{tpu_custom_call.1} parent=0 // pred_check_branch
    %499 = sbr.rel (0) target = $region37
  $region36: #{tpu_custom_call.1} parent=0 // pred_region
    _
  $region37: #{tpu_custom_call.1} parent=0 // pred_fallthru
    _
  // Predicated region
  $region38: #{tpu_custom_call.1} parent=0 // pred_check
    _
  $region39: #{tpu_custom_call.1} parent=0 // pred_check_branch
    %501 = sbr.rel (0) target = $region41
  $region40: #{tpu_custom_call.1} parent=0 // pred_region
    _
  $region41: #{tpu_custom_call.1} parent=0 // pred_fallthru
    _

</llo_original>
